<compile_context>
chip_gen: v5e
topology: v5e:2x2
jax: 0.10.0
libtpu: 0.0.40
codegen_flags: <defaults>
</compile_context>

<pallas_src>
import functools

import jax
import jax.numpy as jnp
from jax.experimental import pallas as pl
from jax.experimental.pallas import tpu as pltpu


def _conv_relu_kernel(x_ref, w_ref, o_ref, *, N):
    # x_ref: (N, KKC+1, S)  im2col patches, channels-first, + trailing ones row
    # w_ref: (Cout, KKC+1)  packed weights + trailing bias column
    # o_ref: (N, Cout, S)   channels-first output (lane axis = S, lane-dense)
    w = w_ref[...]
    for n in range(N):  # tiny static batch -> fully unrolled
        # One MXU matmul per image; bias rides the contraction via the ones row.
        acc = jnp.dot(w, x_ref[n], preferred_element_type=jnp.float32)  # (Cout, S)
        o_ref[n] = jnp.maximum(acc, 0.0).astype(o_ref.dtype)


@functools.partial(jax.jit, static_argnames=("padding", "dilation"))
def conv_relu(x_nchw, weight_oihw, bias, *, padding, dilation):
    """Conv2d(stride=1, padding, dilation) + ReLU.  NCHW in / NCHW out."""
    N, Cin, H, W = x_nchw.shape
    Cout, _, K, _ = weight_oihw.shape
    H_out = H + 2 * padding - dilation * (K - 1)
    W_out = W + 2 * padding - dilation * (K - 1)
    S = H_out * W_out
    KKC = K * K * Cin

    # --- glue (all fused into this single jit program) -------------------
    x_pad = jnp.pad(
        x_nchw, ((0, 0), (0, 0), (padding, padding), (padding, padding)))
    taps = []
    for kh in range(K):
        for kw in range(K):
            taps.append(
                x_pad[:, :,
                      kh * dilation:kh * dilation + H_out,
                      kw * dilation:kw * dilation + W_out])       # (N,Cin,Ho,Wo)
    patches = jnp.stack(taps, axis=1).reshape(N, KKC, S)          # (N, KKC, S)
    # Bias fold: ones row so the bias is part of the MXU contraction.
    patches = jnp.concatenate(
        [patches, jnp.ones((N, 1, S), patches.dtype)], axis=1)    # (N, KKC+1, S)

    # OIHW -> (Cout, kh, kw, Cin) -> (Cout, KKC); ordering matches the taps.
    w2 = jnp.transpose(weight_oihw, (0, 2, 3, 1)).reshape(Cout, KKC)
    wb = jnp.concatenate([w2, bias.reshape(Cout, 1)], axis=1)     # (Cout, KKC+1)

    kernel = functools.partial(_conv_relu_kernel, N=N)

    out = pl.pallas_call(
        kernel,
        out_shape=jax.ShapeDtypeStruct((N, Cout, S), x_nchw.dtype),
        grid_spec=pltpu.PrefetchScalarGridSpec(
            num_scalar_prefetch=0,
            grid=(1,),  # whole problem resident in VMEM; tiling would only add overhead
            in_specs=[
                pl.BlockSpec((N, KKC + 1, S), lambda i: (0, 0, 0)),
                pl.BlockSpec((Cout, KKC + 1), lambda i: (0, 0)),
            ],
            out_specs=pl.BlockSpec((N, Cout, S), lambda i: (0, 0, 0)),
        ),
        compiler_params=pltpu.CompilerParams(
            dimension_semantics=("arbitrary",),
            # Allow XLA to fuse the im2col producer chain into the input
            # pipeline of this call instead of round-tripping through HBM.
            allow_input_fusion=[True, True],
        ),
    )(patches, wb)

    # Already channels-first: only a (free) reshape back to 4-D NCHW.
    return out.reshape(N, Cout, H_out, W_out)


if __name__ == "__main__":
    # Module config (small, consistent with ConvRelu(__init__) signature).
    N, Cin, Cout = 2, 4, 8
    H = W = 16
    K, padding, dilation = 3, 2, 2   # -> output spatial stays 16x16

    key = jax.random.PRNGKey(0)
    kx, kw, kb = jax.random.split(key, 3)

    x = jax.random.normal(kx, (N, Cin, H, W), dtype=jnp.float32)

    # Deterministic PyTorch-style init: uniform(-1/sqrt(fan_in), 1/sqrt(fan_in)).
    fan_in = Cin * K * K
    bound = 1.0 / (fan_in ** 0.5)
    weight = jax.random.uniform(kw, (Cout, Cin, K, K), jnp.float32, -bound, bound)
    bias = jax.random.uniform(kb, (Cout,), jnp.float32, -bound, bound)

    out = conv_relu(x, weight, bias, padding=padding, dilation=dilation)
    out = jax.block_until_ready(out)

    # Reference check (plain XLA conv) to validate kernel semantics.
    ref = jax.lax.conv_general_dilated(
        x, weight, window_strides=(1, 1),
        padding=((padding, padding), (padding, padding)),
        rhs_dilation=(dilation, dilation),
        dimension_numbers=("NCHW", "OIHW", "NCHW"),
    )
    ref = jnp.maximum(ref + bias[None, :, None, None], 0.0)

    assert out.shape == (N, Cout, H, W), out.shape
    assert jnp.allclose(out, ref, atol=1e-3, rtol=1e-3), "mismatch vs reference conv"

    print("KERNEL_OK")
</pallas_src>

<mosaic_0001>
module attributes {stable_mosaic.version = 11 : i64} {
  func.func @_conv_relu_kernel(%arg0: i32, %arg1: memref<2x37x256xf32, #tpu.memory_space<vmem>>, %arg2: memref<8x37xf32, #tpu.memory_space<vmem>>, %arg3: memref<2x8x256xf32, #tpu.memory_space<vmem>>) attributes {dimension_semantics = [#tpu.dimension_semantics<arbitrary>], iteration_bounds = array<i64: 1>, scalar_prefetch = 0 : i64, scratch_operands = 0 : i64, tpu.core_type = #tpu.core_type<tc>, window_params = [{pipeline_mode = #tpu.pipeline_mode<synchronous>, transform_indices = @transform_0, window_bounds = array<i64: 2, 37, 256>}, {pipeline_mode = #tpu.pipeline_mode<synchronous>, transform_indices = @transform_1, window_bounds = array<i64: 8, 37>}, {pipeline_mode = #tpu.pipeline_mode<synchronous>, transform_indices = @transform_2, window_bounds = array<i64: 2, 8, 256>}]} {
    %c0 = arith.constant 0 : index
    %c0_0 = arith.constant 0 : index
    %0 = vector.load %arg2[%c0, %c0_0] : memref<8x37xf32, #tpu.memory_space<vmem>>, vector<8x37xf32>
    %c0_1 = arith.constant 0 : index
    %c0_2 = arith.constant 0 : index
    %c0_3 = arith.constant 0 : index
    %1 = vector.load %arg1[%c0_1, %c0_2, %c0_3] : memref<2x37x256xf32, #tpu.memory_space<vmem>>, vector<1x37x256xf32>
    %2 = vector.shape_cast %1 : vector<1x37x256xf32> to vector<37x256xf32>
    %cst = arith.constant dense<0.000000e+00> : vector<8x256xf32>
    %3 = tpu.matmul %0, %2, %cst {dimension_numbers = #tpu.dot_dimension_numbers<[1], [0], [0], [1], [0, 0, 1, 1], [], []>} : vector<8x37xf32>, vector<37x256xf32>, vector<8x256xf32> -> vector<8x256xf32>
    %cst_4 = arith.constant 0.000000e+00 : f32
    %4 = vector.broadcast %cst_4 : f32 to vector<8x256xf32>
    %5 = arith.maximumf %3, %4 : vector<8x256xf32>
    %c0_5 = arith.constant 0 : index
    %c0_6 = arith.constant 0 : index
    %c0_7 = arith.constant 0 : index
    %6 = vector.load %arg3[%c0_5, %c0_6, %c0_7] : memref<2x8x256xf32, #tpu.memory_space<vmem>>, vector<1x8x256xf32>
    %7 = vector.shape_cast %6 : vector<1x8x256xf32> to vector<8x256xf32>
    %8 = vector.shape_cast %5 : vector<8x256xf32> to vector<1x8x256xf32>
    tpu.vector_store %arg3[%c0_5, %c0_6, %c0_7], %8 {strides = array<i32>} : memref<2x8x256xf32, #tpu.memory_space<vmem>>, vector<1x8x256xf32>,
    %c1 = arith.constant 1 : index
    %c0_8 = arith.constant 0 : index
    %c0_9 = arith.constant 0 : index
    %9 = vector.load %arg1[%c1, %c0_8, %c0_9] : memref<2x37x256xf32, #tpu.memory_space<vmem>>, vector<1x37x256xf32>
    %10 = vector.shape_cast %9 : vector<1x37x256xf32> to vector<37x256xf32>
    %cst_10 = arith.constant dense<0.000000e+00> : vector<8x256xf32>
    %11 = tpu.matmul %0, %10, %cst_10 {dimension_numbers = #tpu.dot_dimension_numbers<[1], [0], [0], [1], [0, 0, 1, 1], [], []>} : vector<8x37xf32>, vector<37x256xf32>, vector<8x256xf32> -> vector<8x256xf32>
    %cst_11 = arith.constant 0.000000e+00 : f32
    %12 = vector.broadcast %cst_11 : f32 to vector<8x256xf32>
    %13 = arith.maximumf %11, %12 : vector<8x256xf32>
    %c1_12 = arith.constant 1 : index
    %c0_13 = arith.constant 0 : index
    %c0_14 = arith.constant 0 : index
    %14 = vector.load %arg3[%c1_12, %c0_13, %c0_14] : memref<2x8x256xf32, #tpu.memory_space<vmem>>, vector<1x8x256xf32>
    %15 = vector.shape_cast %14 : vector<1x8x256xf32> to vector<8x256xf32>
    %16 = vector.shape_cast %13 : vector<8x256xf32> to vector<1x8x256xf32>
    tpu.vector_store %arg3[%c1_12, %c0_13, %c0_14], %16 {strides = array<i32>} : memref<2x8x256xf32, #tpu.memory_space<vmem>>, vector<1x8x256xf32>,
    return
  }
  func.func @transform_0(%arg0: i32) -> (i32, i32, i32) {
    %c0_i32 = arith.constant 0 : i32
    %c0_i32_0 = arith.constant 0 : i32
    %c0_i32_1 = arith.constant 0 : i32
    %c0_i32_2 = arith.constant 0 : i32
    return %c0_i32, %c0_i32_0, %c0_i32_1 : i32, i32, i32
  }
  func.func @transform_1(%arg0: i32) -> (i32, i32) {
    %c0_i32 = arith.constant 0 : i32
    %c0_i32_0 = arith.constant 0 : i32
    %c0_i32_1 = arith.constant 0 : i32
    return %c0_i32, %c0_i32_0 : i32, i32
  }
  func.func @transform_2(%arg0: i32) -> (i32, i32, i32) {
    %c0_i32 = arith.constant 0 : i32
    %c0_i32_0 = arith.constant 0 : i32
    %c0_i32_1 = arith.constant 0 : i32
    %c0_i32_2 = arith.constant 0 : i32
    return %c0_i32, %c0_i32_0, %c0_i32_1 : i32, i32, i32
  }
}

</mosaic_0001>

<llo_original>
// kernel: conv_relu.2
$region0: #{conv_relu.2}
  #allocation0 [shape = 'u32[]', space=smem, size = 0x4, offset = 0x4, fixed_abs, tag = 'smem constant byte address 0x4 - core index']
  #allocation1 [shape = 'u32[72,128]{1,0:T(1,128)}', space=vmem, size = 0x9000, scoped, tag = 'internal scratch']
  #allocation2 [shape = 'u32[2048]{0}', space=vmem, size = 0x2000, scoped, tag = 'scoped memory for conv_relu.2']
  #allocation3 [shape = 'u32[2048]{0}', space=vmem, size = 0x2000, scoped, tag = 'scoped memory for conv_relu.2']
  #allocation4 [shape = 'u32[2048]{0}', space=vmem, size = 0x2000, scoped, tag = 'scoped memory for conv_relu.2']
  #allocation5 [shape = 'u32[2048]{0}', space=vmem, size = 0x2000, scoped, tag = 'scoped memory for conv_relu.2']
  #allocation6 [shape = 'u32[2048]{0}', space=vmem, size = 0x2000, scoped, tag = 'scoped memory for conv_relu.2']
  #allocation7 [shape = 'u32[2048]{0}', space=vmem, size = 0x2000, scoped, tag = 'scoped memory for conv_relu.2']
  #allocation8 [shape = 'u32[2048]{0}', space=vmem, size = 0x2000, scoped, tag = 'scoped memory for conv_relu.2']
  #allocation9 [shape = 'u32[2048]{0}', space=vmem, size = 0x2000, scoped, tag = 'scoped memory for conv_relu.2']
  #allocation10 [shape = 'u32[2048]{0}', space=vmem, size = 0x2000, scoped, tag = 'scoped memory for conv_relu.2']
  #allocation11 [shape = 'u32[2048]{0}', space=vmem, size = 0x2000, scoped, tag = 'scoped memory for conv_relu.2']
  #allocation12 [shape = 'u32[2048]{0}', space=vmem, size = 0x2000, scoped, tag = 'scoped memory for conv_relu.2']
  #allocation13 [shape = 'u32[2048]{0}', space=vmem, size = 0x2000, scoped, tag = 'scoped memory for conv_relu.2']
  #allocation14 [shape = 'u32[2048]{0}', space=vmem, size = 0x2000, scoped, tag = 'scoped memory for conv_relu.2']
  #allocation15 [shape = 'u32[2048]{0}', space=vmem, size = 0x2000, scoped, tag = 'scoped memory for conv_relu.2']
  #allocation16 [shape = 'u32[2048]{0}', space=vmem, size = 0x2000, scoped, tag = 'scoped memory for conv_relu.2']
  %s0 = inlined_call_operand.vmem [shape: f32[2,36,256], index: 0, kind: input, shape index: {}]
  %s1 = inlined_call_operand.<no memory space> [shape: f32[], index: 1, kind: input, shape index: {}]
  %s2 = inlined_call_operand.vmem [shape: f32[8,1], index: 2, kind: input, shape index: {}]
  %s3 = inlined_call_operand.<no memory space> [shape: f32[], index: 3, kind: input, shape index: {}]
  %s4 = inlined_call_operand.vmem [shape: f32[8,36], index: 4, kind: input, shape index: {}]
  %s5 = inlined_call_operand.vmem [shape: f32[2,8,256], index: 5, kind: output, shape index: {}]
  %s6 = sld [smem:[#allocation0]]
  $region22: #{conv_relu.2} parent=0
    _
  %s8 = ssub.s32 1, %s6
  %s9 = scalar_select 0, %s8, %s6
  %v10 = vstv %s1
  %v11 = vstv %s3
  %v12 = vstv %s3
  $region1: #{conv_relu.2} parent=0
    #allocation17 [shape = 'u8[81920]{0}', space=vmem, size = 0x14000, dematerialized = true, scoped, tag = 'FusionAdapter Buffer %fusion.1 = f32[2,37,256]{2,1,0:T(8,128)} fusion(%param_0.68, %param_1.70), kind=kLoop, calls=%fused_computation.9.clone, metadata={op_name="jit(conv_relu)/concatenate" stack_frame_id=11}']
    #allocation18 [shape = 'u8[4096]{0}', space=vmem, size = 0x1000, dematerialized = true, scoped, tag = 'FusionAdapter Buffer %fusion.18 = f32[8,37]{1,0:T(8,128)} fusion(%param_2.39, %param_3.40, %param_4.8), kind=kLoop, calls=%fused_computation.27.clone, metadata={op_name="jit(conv_relu)/concatenate" stack_frame_id=14}']
    // Predicated region
    $region2: #{conv_relu.2} parent=1 // pred_check
      _
    $region3: #{conv_relu.2} parent=1 // pred_check_branch
      %14 = sbr.rel (0) target = $region5
    $region4: #{conv_relu.2} parent=1 // pred_region
      _
    $region5: #{conv_relu.2} parent=1 // pred_fallthru
      _
    // Predicated region
    $region6: #{conv_relu.2} parent=1 // pred_check
      _
    $region7: #{conv_relu.2} parent=1 // pred_check_branch
      %16 = sbr.rel (0) target = $region9
    $region8: #{conv_relu.2} parent=1 // pred_region
      %s18 = ssub.s32 1, 0
      %s19 = smul.u32 8, %s18
      %p20 = scmp.lt.s32.totalorder 0, 0
      %s21 = scalar_select %p20, 0, 0
      %s22 = smul.addr %s21, 8
      %s23 = scalar_lea.vmem %s2, %s22
      %s25 = ssub.s32 1, 0
      %s26 = smul.u32 8, %s25
    $region9: #{conv_relu.2} parent=1 // pred_fallthru
      _
    // Predicated region
    $region10: #{conv_relu.2} parent=1 // pred_check
      _
    $region11: #{conv_relu.2} parent=1 // pred_check_branch
      %28 = sbr.rel (0) target = $region13
    $region12: #{conv_relu.2} parent=1 // pred_region
      _
    $region13: #{conv_relu.2} parent=1 // pred_fallthru
      _
    %s30 = ssub.s32 1, 0
    %s31 = smul.u32 8, %s30
    %p32 = scmp.lt.s32.totalorder 0, 0
    %s33 = scalar_select %p32, 0, 0
    %s34 = smul.addr %s33, 8
    %s35 = scalar_lea.vmem %s2, %s34
    %s37 = ssub.s32 1, 0
    %s38 = smul.u32 8, %s37
    %p39 = scmp.lt.s32.totalorder 0, 0
    %s40 = scalar_select %p39, 0, 0
    %s41 = smul.addr %s40, 8
    %s42 = scalar_lea.vmem %s2, %s41
    %s44 = ssub.s32 1, 0
    %s45 = smul.u32 8, %s44
    %v46 = vld [vmem:[%s0] sm:$0xff]
    %v47 = vlaneseq
    %v48 = vshrl.u32 %v47, 7
    %vm50 = vcmp.lt.s32.totalorder %v48, 36
    %v51 = vsel %vm50, %v46, %v10
    %s53 = ssub.s32 256, 1
    %54 = vst [vmem:[#allocation17] sm:%s53] %v51
    %s55 = scalar_lea.vmem %s0, 8
    %v56 = vld [vmem:[%s55] sm:$0xff]
    %v57 = vlaneseq
    %v58 = vshrl.u32 %v57, 7
    %vm60 = vcmp.lt.s32.totalorder %v58, 36
    %v61 = vsel %vm60, %v56, %v10
    %s62 = scalar_lea.vmem [#allocation17], 8
    %s64 = ssub.s32 256, 1
    %65 = vst [vmem:[%s62] sm:%s64] %v61
    %s66 = scalar_lea.vmem %s0, 16
    %v67 = vld [vmem:[%s66] sm:$0xff]
    %v68 = vlaneseq
    %v69 = vshrl.u32 %v68, 7
    %v70 = vadd.s32 %v69, 8
    %vm71 = vcmp.lt.s32.totalorder %v70, 36
    %v72 = vsel %vm71, %v67, %v10
    %s73 = scalar_lea.vmem [#allocation17], 16
    %s75 = ssub.s32 256, 1
    %76 = vst [vmem:[%s73] sm:%s75] %v72
    %s77 = scalar_lea.vmem %s0, 24
    %v78 = vld [vmem:[%s77] sm:$0xff]
    %v79 = vlaneseq
    %v80 = vshrl.u32 %v79, 7
    %v81 = vadd.s32 %v80, 8
    %vm82 = vcmp.lt.s32.totalorder %v81, 36
    %v83 = vsel %vm82, %v78, %v10
    %s84 = scalar_lea.vmem [#allocation17], 24
    %s86 = ssub.s32 256, 1
    %87 = vst [vmem:[%s84] sm:%s86] %v83
    %s88 = scalar_lea.vmem %s0, 32
    %v89 = vld [vmem:[%s88] sm:$0xff]
    %v90 = vlaneseq
    %v91 = vshrl.u32 %v90, 7
    %v92 = vadd.s32 %v91, 16
    %vm93 = vcmp.lt.s32.totalorder %v92, 36
    %v94 = vsel %vm93, %v89, %v10
    %s95 = scalar_lea.vmem [#allocation17], 32
    %s97 = ssub.s32 256, 1
    %98 = vst [vmem:[%s95] sm:%s97] %v94
    %s99 = scalar_lea.vmem %s0, 40
    %v100 = vld [vmem:[%s99] sm:$0xff]
    %v101 = vlaneseq
    %v102 = vshrl.u32 %v101, 7
    %v103 = vadd.s32 %v102, 16
    %vm104 = vcmp.lt.s32.totalorder %v103, 36
    %v105 = vsel %vm104, %v100, %v10
    %s106 = scalar_lea.vmem [#allocation17], 40
    %s108 = ssub.s32 256, 1
    %109 = vst [vmem:[%s106] sm:%s108] %v105
    %s110 = scalar_lea.vmem %s0, 48
    %v111 = vld [vmem:[%s110] sm:$0xff]
    %v112 = vlaneseq
    %v113 = vshrl.u32 %v112, 7
    %v114 = vadd.s32 %v113, 24
    %vm115 = vcmp.lt.s32.totalorder %v114, 36
    %v116 = vsel %vm115, %v111, %v10
    %s117 = scalar_lea.vmem [#allocation17], 48
    %s119 = ssub.s32 256, 1
    %120 = vst [vmem:[%s117] sm:%s119] %v116
    %s121 = scalar_lea.vmem %s0, 56
    %v122 = vld [vmem:[%s121] sm:$0xff]
    %v123 = vlaneseq
    %v124 = vshrl.u32 %v123, 7
    %v125 = vadd.s32 %v124, 24
    %vm126 = vcmp.lt.s32.totalorder %v125, 36
    %v127 = vsel %vm126, %v122, %v10
    %s128 = scalar_lea.vmem [#allocation17], 56
    %s130 = ssub.s32 256, 1
    %131 = vst [vmem:[%s128] sm:%s130] %v127
    %s132 = scalar_lea.vmem %s0, 64
    %v133 = vld [vmem:[%s132] sm:$0xff]
    %v134 = vlaneseq
    %v135 = vshrl.u32 %v134, 7
    %v136 = vadd.s32 %v135, 32
    %vm137 = vcmp.lt.s32.totalorder %v136, 36
    %v138 = vsel %vm137, %v133, %v10
    %s139 = scalar_lea.vmem [#allocation17], 64
    %s141 = ssub.s32 256, 1
    %142 = vst [vmem:[%s139] sm:%s141] %v138
    %s143 = scalar_lea.vmem %s0, 72
    %v144 = vld [vmem:[%s143] sm:$0xff]
    %v145 = vlaneseq
    %v146 = vshrl.u32 %v145, 7
    %v147 = vadd.s32 %v146, 32
    %vm148 = vcmp.lt.s32.totalorder %v147, 36
    %v149 = vsel %vm148, %v144, %v10
    %s150 = scalar_lea.vmem [#allocation17], 72
    %s152 = ssub.s32 256, 1
    %153 = vst [vmem:[%s150] sm:%s152] %v149
    %s154 = scalar_lea.vmem %s0, 80
    %v155 = vld [vmem:[%s154] sm:$0xff]
    %v156 = vlaneseq
    %v157 = vshrl.u32 %v156, 7
    %vm159 = vcmp.lt.s32.totalorder %v157, 36
    %v160 = vsel %vm159, %v155, %v10
    %s161 = scalar_lea.vmem [#allocation17], 80
    %s163 = ssub.s32 256, 1
    %164 = vst [vmem:[%s161] sm:%s163] %v160
    %s165 = scalar_lea.vmem %s0, 88
    %v166 = vld [vmem:[%s165] sm:$0xff]
    %v167 = vlaneseq
    %v168 = vshrl.u32 %v167, 7
    %vm170 = vcmp.lt.s32.totalorder %v168, 36
    %v171 = vsel %vm170, %v166, %v10
    %s172 = scalar_lea.vmem [#allocation17], 88
    %s174 = ssub.s32 256, 1
    %175 = vst [vmem:[%s172] sm:%s174] %v171
    %s176 = scalar_lea.vmem %s0, 96
    %v177 = vld [vmem:[%s176] sm:$0xff]
    %v178 = vlaneseq
    %v179 = vshrl.u32 %v178, 7
    %v180 = vadd.s32 %v179, 8
    %vm181 = vcmp.lt.s32.totalorder %v180, 36
    %v182 = vsel %vm181, %v177, %v10
    %s183 = scalar_lea.vmem [#allocation17], 96
    %s185 = ssub.s32 256, 1
    %186 = vst [vmem:[%s183] sm:%s185] %v182
    %s187 = scalar_lea.vmem %s0, 104
    %v188 = vld [vmem:[%s187] sm:$0xff]
    %v189 = vlaneseq
    %v190 = vshrl.u32 %v189, 7
    %v191 = vadd.s32 %v190, 8
    %vm192 = vcmp.lt.s32.totalorder %v191, 36
    %v193 = vsel %vm192, %v188, %v10
    %s194 = scalar_lea.vmem [#allocation17], 104
    %s196 = ssub.s32 256, 1
    %197 = vst [vmem:[%s194] sm:%s196] %v193
    %s198 = scalar_lea.vmem %s0, 112
    %v199 = vld [vmem:[%s198] sm:$0xff]
    %v200 = vlaneseq
    %v201 = vshrl.u32 %v200, 7
    %v202 = vadd.s32 %v201, 16
    %vm203 = vcmp.lt.s32.totalorder %v202, 36
    %v204 = vsel %vm203, %v199, %v10
    %s205 = scalar_lea.vmem [#allocation17], 112
    %s207 = ssub.s32 256, 1
    %208 = vst [vmem:[%s205] sm:%s207] %v204
    %s209 = scalar_lea.vmem %s0, 120
    %v210 = vld [vmem:[%s209] sm:$0xff]
    %v211 = vlaneseq
    %v212 = vshrl.u32 %v211, 7
    %v213 = vadd.s32 %v212, 16
    %vm214 = vcmp.lt.s32.totalorder %v213, 36
    %v215 = vsel %vm214, %v210, %v10
    %s216 = scalar_lea.vmem [#allocation17], 120
    %s218 = ssub.s32 256, 1
    %219 = vst [vmem:[%s216] sm:%s218] %v215
    %s220 = scalar_lea.vmem %s0, 128
    %v221 = vld [vmem:[%s220] sm:$0xff]
    %v222 = vlaneseq
    %v223 = vshrl.u32 %v222, 7
    %v224 = vadd.s32 %v223, 24
    %vm225 = vcmp.lt.s32.totalorder %v224, 36
    %v226 = vsel %vm225, %v221, %v10
    %s227 = scalar_lea.vmem [#allocation17], 128
    %s229 = ssub.s32 256, 1
    %230 = vst [vmem:[%s227] sm:%s229] %v226
    %s231 = scalar_lea.vmem %s0, 136
    %v232 = vld [vmem:[%s231] sm:$0xff]
    %v233 = vlaneseq
    %v234 = vshrl.u32 %v233, 7
    %v235 = vadd.s32 %v234, 24
    %vm236 = vcmp.lt.s32.totalorder %v235, 36
    %v237 = vsel %vm236, %v232, %v10
    %s238 = scalar_lea.vmem [#allocation17], 136
    %s240 = ssub.s32 256, 1
    %241 = vst [vmem:[%s238] sm:%s240] %v237
    %s242 = scalar_lea.vmem %s0, 144
    %v243 = vld [vmem:[%s242] sm:$0xff]
    %v244 = vlaneseq
    %v245 = vshrl.u32 %v244, 7
    %v246 = vadd.s32 %v245, 32
    %vm247 = vcmp.lt.s32.totalorder %v246, 36
    %v248 = vsel %vm247, %v243, %v10
    %s249 = scalar_lea.vmem [#allocation17], 144
    %s251 = ssub.s32 256, 1
    %252 = vst [vmem:[%s249] sm:%s251] %v248
    %s253 = scalar_lea.vmem %s0, 152
    %v254 = vld [vmem:[%s253] sm:$0xff]
    %v255 = vlaneseq
    %v256 = vshrl.u32 %v255, 7
    %v257 = vadd.s32 %v256, 32
    %vm258 = vcmp.lt.s32.totalorder %v257, 36
    %v259 = vsel %vm258, %v254, %v10
    %s260 = scalar_lea.vmem [#allocation17], 152
    %s262 = ssub.s32 256, 1
    %263 = vst [vmem:[%s260] sm:%s262] %v259
    %s264 = ssub.s32 0, 0
    %p265 = scmp.lt.s32.totalorder %s264, 0
    %s266 = scalar_select %p265, 0, 255
    %v267 = vld [vmem:[%s42] sm:%s266]
    %v268 = vlaneseq
    %v269 = vand.u32 %v268, 127
    %v270 = vadd.s32 %v269, 128
    %vm271 = vcmp.lt.s32.totalorder %v270, 129
    %v272 = vsel %vm271, %v267, %v11
    %v273 = vlaneseq
    %v274 = vand.u32 %v273, 127
    %vm275 = vcmp.lt.s32.totalorder %v274, 92
    %v276 = vsel %vm275, %v272, %v11
    %277 = vrot.lane.b32.xlu0 %v276, 36
    %v278 = vpop.permute.xlu0 %277
    %v279 = vld [vmem:[%s4] sm:$0xff]
    %v280 = vlaneseq
    %v281 = vand.u32 %v280, 127
    %vm283 = vcmp.lt.s32.totalorder %v281, 36
    %v284 = vsel %vm283, %v279, %v12
    %285 = xla_tuple %v284, %v278
    %286 = xla_tuple %285
    %v287 = vmax.f32 %v284, %v278
    %288 = xla_tuple %v287
    %s290 = ssub.s32 256, 1
    %291 = vst [vmem:[#allocation18] sm:%s290] %v287
    %v292 = vld [vmem:[#allocation18] sm:$0xff]
    %v293 = vld [vmem:[#allocation17] sm:$0xff]
    %v294 = vld [vmem:[#allocation17 + $0x8] sm:$0xff]
    %v295 = vld [vmem:[#allocation17 + $0x10] sm:$0xff]
    %v296 = vld [vmem:[#allocation17 + $0x18] sm:$0xff]
    %v297 = vld [vmem:[#allocation17 + $0x20] sm:$0xff]
    %v298 = vld [vmem:[#allocation17 + $0x28] sm:$0xff]
    %v299 = vld [vmem:[#allocation17 + $0x30] sm:$0xff]
    %v300 = vld [vmem:[#allocation17 + $0x38] sm:$0xff]
    %v301 = vld [vmem:[#allocation17 + $0x40] sm:$0x1f]
    %v302 = vld [vmem:[#allocation17 + $0x48] sm:$0x1f]
    %vm303 = vcmask 302080
    %v305 = vsel %vm303, %v292, 0
    %vm307 = vcmask 1044480
    %v309 = vsel %vm307, %v301, 0
    %v312 = vsel %vm307, %v302, 0
    %314 = vmatpush.msra.mxu0 0.0
    %315 = vmatpush.msra.mxu0 0.0
    %316 = vmatpush.msra.mxu0 0.0
    %317 = vmatpush.msra.mxu0 0.0
    %318 = vmatpush.msra.mxu0 0.0
    %319 = vmatpush.msra.mxu0 0.0
    %320 = vmatpush.msra.mxu0 0.0
    %321 = vmatpush.msra.mxu0 0.0
    %322 = vmatpush.msra.mxu0 0.0
    %323 = vmatpush.msra.mxu0 0.0
    %324 = vmatpush.msra.mxu0 0.0
    %325 = vmatpush.msra.mxu0 %v309
    %326 = vmatpush.msra.mxu0 %v299
    %327 = vmatpush.msra.mxu0 %v297
    %328 = vmatpush.msra.mxu0 %v295
    %329 = vmatpush.msra.mxu0 %v293
    %330 = vmatmul.f32.gmra.mxu0 %v305
    %v331 = vpop.f32.mrf.mxu0
    %v332 = vadd.f32 0.0, %v331
    %333 = vdwg.mxu0
    %334 = vmatpush.msra.mxu0 0.0
    %335 = vmatpush.msra.mxu0 0.0
    %336 = vmatpush.msra.mxu0 0.0
    %337 = vmatpush.msra.mxu0 0.0
    %338 = vmatpush.msra.mxu0 0.0
    %339 = vmatpush.msra.mxu0 0.0
    %340 = vmatpush.msra.mxu0 0.0
    %341 = vmatpush.msra.mxu0 0.0
    %342 = vmatpush.msra.mxu0 0.0
    %343 = vmatpush.msra.mxu0 0.0
    %344 = vmatpush.msra.mxu0 0.0
    %345 = vmatpush.msra.mxu0 %v312
    %346 = vmatpush.msra.mxu0 %v300
    %347 = vmatpush.msra.mxu0 %v298
    %348 = vmatpush.msra.mxu0 %v296
    %349 = vmatpush.msra.mxu0 %v294
    %350 = vmatmul.f32.gmra.mxu0 %v305
    %v351 = vpop.f32.mrf.mxu0
    %v352 = vadd.f32 0.0, %v351
    %353 = vdwg.mxu0
    %v354 = vmax.f32 %v332, 0.0
    %v355 = vmax.f32 %v352, 0.0
    %356 = vst [vmem:[%s5] sm:$0xff] %v354
    %357 = vst [vmem:[%s5 + $0x8] sm:$0xff] %v355
    %s358 = scalar_lea.vmem [#allocation17], 80
    %v359 = vld [vmem:[%s358] sm:$0xff]
    %v360 = vld [vmem:[%s358 + $0x8] sm:$0xff]
    %v361 = vld [vmem:[%s358 + $0x10] sm:$0xff]
    %v362 = vld [vmem:[%s358 + $0x18] sm:$0xff]
    %v363 = vld [vmem:[%s358 + $0x20] sm:$0xff]
    %v364 = vld [vmem:[%s358 + $0x28] sm:$0xff]
    %v365 = vld [vmem:[%s358 + $0x30] sm:$0xff]
    %v366 = vld [vmem:[%s358 + $0x38] sm:$0xff]
    %v367 = vld [vmem:[%s358 + $0x40] sm:$0x1f]
    %v368 = vld [vmem:[%s358 + $0x48] sm:$0x1f]
    %v370 = vsel %vm307, %v367, 0
    %v373 = vsel %vm307, %v368, 0
    %375 = vmatpush.msra.mxu0 0.0
    %376 = vmatpush.msra.mxu0 0.0
    %377 = vmatpush.msra.mxu0 0.0
    %378 = vmatpush.msra.mxu0 0.0
    %379 = vmatpush.msra.mxu0 0.0
    %380 = vmatpush.msra.mxu0 0.0
    %381 = vmatpush.msra.mxu0 0.0
    %382 = vmatpush.msra.mxu0 0.0
    %383 = vmatpush.msra.mxu0 0.0
    %384 = vmatpush.msra.mxu0 0.0
    %385 = vmatpush.msra.mxu0 0.0
    %386 = vmatpush.msra.mxu0 %v370
    %387 = vmatpush.msra.mxu0 %v365
    %388 = vmatpush.msra.mxu0 %v363
    %389 = vmatpush.msra.mxu0 %v361
    %390 = vmatpush.msra.mxu0 %v359
    %391 = vmatmul.f32.gmra.mxu0 %v305
    %v392 = vpop.f32.mrf.mxu0
    %v393 = vadd.f32 0.0, %v392
    %394 = vdwg.mxu0
    %395 = vmatpush.msra.mxu0 0.0
    %396 = vmatpush.msra.mxu0 0.0
    %397 = vmatpush.msra.mxu0 0.0
    %398 = vmatpush.msra.mxu0 0.0
    %399 = vmatpush.msra.mxu0 0.0
    %400 = vmatpush.msra.mxu0 0.0
    %401 = vmatpush.msra.mxu0 0.0
    %402 = vmatpush.msra.mxu0 0.0
    %403 = vmatpush.msra.mxu0 0.0
    %404 = vmatpush.msra.mxu0 0.0
    %405 = vmatpush.msra.mxu0 0.0
    %406 = vmatpush.msra.mxu0 %v373
    %407 = vmatpush.msra.mxu0 %v366
    %408 = vmatpush.msra.mxu0 %v364
    %409 = vmatpush.msra.mxu0 %v362
    %410 = vmatpush.msra.mxu0 %v360
    %411 = vmatmul.f32.gmra.mxu0 %v305
    %v412 = vpop.f32.mrf.mxu0
    %v413 = vadd.f32 0.0, %v412
    %414 = vdwg.mxu0
    %v415 = vmax.f32 %v393, 0.0
    %v416 = vmax.f32 %v413, 0.0
    %s417 = scalar_lea.vmem %s5, 16
    %418 = vst [vmem:[%s417] sm:$0xff] %v415
    %419 = vst [vmem:[%s417 + $0x8] sm:$0xff] %v416
    // Predicated region
    $region14: #{conv_relu.2} parent=1 // pred_check
      _
    $region15: #{conv_relu.2} parent=1 // pred_check_branch
      %421 = sbr.rel (0) target = $region17
    $region16: #{conv_relu.2} parent=1 // pred_region
      _
    $region17: #{conv_relu.2} parent=1 // pred_fallthru
      _
    // Predicated region
    $region18: #{conv_relu.2} parent=1 // pred_check
      _
    $region19: #{conv_relu.2} parent=1 // pred_check_branch
      %423 = sbr.rel (0) target = $region21
    $region20: #{conv_relu.2} parent=1 // pred_region
      _
    $region21: #{conv_relu.2} parent=1 // pred_fallthru
      _

</llo_original>
